<compile_context>
chip_gen: v7x
topology: tpu7x:2x2x1
jax: 0.10.0
libtpu: 0.0.40
codegen_flags: <defaults>
</compile_context>

<pallas_src>
import jax
import jax.numpy as jnp
from jax.experimental import pallas as pl
from jax.experimental.pallas import tpu as pltpu


def _bert_pooler_kernel(x_ref, w_ref, b_ref, o_ref):
    # x: (tm, K) @ w: (K, tn) -> (tm, tn). Native-dtype (bf16) operands on the
    # MXU, f32 accumulation.
    h = jnp.dot(x_ref[...], w_ref[...], preferred_element_type=jnp.float32)
    h = h + b_ref[...].astype(jnp.float32)          # (1, tn) bias row, broadcast
    o_ref[...] = jnp.tanh(h).astype(o_ref.dtype)    # tanh on the EUP, then cast


def bert_pooler(hidden_states, w, b, *, tm=512, tn=512,
                compute_dtype=jnp.bfloat16):
    """BertPooler forward: tanh(hidden_states[:, 0] @ W^T + b).

    hidden_states: [B, S, H]
    w:             [H, H]  nn.Linear weight in PyTorch [out, in] layout
    b:             [H]
    returns:       [B, H] in hidden_states.dtype
    """
    B, S, H = hidden_states.shape
    out_dtype = hidden_states.dtype

    # [CLS] slice (B*H elements — tiny next to the [H,H] weight read).
    # TODO(synk): fold the slice into the x BlockSpec once a size-1
    # second-to-last block dim ((tm, 1, H) on the [B,S,H] input) lowers
    # reliably on all targets; kept in the wrapper so the kernel always runs.
    x = hidden_states[:, 0, :]

    # Pre-transpose to [in, out] once (in a real model: at parameter-prep
    # time) so the kernel never transposes the weight tile.
    w_kn = jnp.swapaxes(w, 0, 1)

    if compute_dtype is not None:
        x = x.astype(compute_dtype)
        w_kn = w_kn.astype(compute_dtype)

    # Tile sizes: clamp to the array extents (full-dim blocks are always
    # legal); otherwise the defaults are multiples of (8, 128). Ragged last
    # blocks are handled by Pallas' masked boundary reads/stores.
    tm_ = B if B <= tm else tm
    tn_ = H if H <= tn else tn
    grid = (pl.cdiv(B, tm_), pl.cdiv(H, tn_))

    b2 = b.reshape(1, H)

    # Double-buffered tile footprint -> explicit scoped-VMEM limit (v5e's
    # default is only 16 MiB; v6e/v7x default 32 MiB).
    esize = jnp.dtype(x.dtype).itemsize
    osize = jnp.dtype(out_dtype).itemsize
    bsize = jnp.dtype(b2.dtype).itemsize
    tile_bytes = 2 * (tm_ * H * esize + H * tn_ * esize + tn_ * bsize
                      + tm_ * tn_ * osize)
    vmem_limit = int(min(max(2 * tile_bytes, 8 << 20), 32 << 20))

    cost = pl.CostEstimate(
        flops=2 * B * H * H,
        transcendentals=B * H,
        bytes_accessed=(B * H * esize + H * H * esize + H * bsize
                        + B * H * osize),
    )

    out = pl.pallas_call(
        _bert_pooler_kernel,
        out_shape=jax.ShapeDtypeStruct((B, H), out_dtype),
        grid_spec=pltpu.PrefetchScalarGridSpec(
            num_scalar_prefetch=0,
            grid=grid,
            in_specs=[
                # Activation rows: invariant along j (no re-DMA on revisit),
                # streamed along i.
                pl.BlockSpec((tm_, H), lambda i, j: (i, 0)),
                # Weight column tiles: streamed along j with default
                # double-buffering so the dominant weight DMA hides under the
                # matmul + tanh of the previous tile.
                pl.BlockSpec((H, tn_), lambda i, j: (0, j)),
                # Bias column tile.
                pl.BlockSpec((1, tn_), lambda i, j: (0, j)),
            ],
            out_specs=pl.BlockSpec((tm_, tn_), lambda i, j: (i, j)),
        ),
        compiler_params=pltpu.CompilerParams(
            dimension_semantics=("parallel", "parallel"),
            vmem_limit_bytes=vmem_limit,
        ),
        cost_estimate=cost,
    )(x, w_kn, b2)

    return out


def reference(hidden_states, w, b):
    return jnp.tanh(hidden_states[:, 0, :] @ w.T + b)


if __name__ == "__main__":
    # Small deterministic example consistent with the module: batch=2, seq=8,
    # hidden=32 (real BERT uses H=768/1024, multiples of 128, which keeps the
    # output stores lane-dense; H=32 here is just for the correctness check).
    B, S, H = 2, 8, 32
    key = jax.random.PRNGKey(0)
    k1, k2, k3 = jax.random.split(key, 3)

    hidden_states = jax.random.normal(k1, (B, S, H), dtype=jnp.float32)
    w = 0.05 * jax.random.normal(k2, (H, H), dtype=jnp.float32)   # [out, in]
    b = 0.01 * jax.random.normal(k3, (H,), dtype=jnp.float32)

    ref = reference(hidden_states, w, b)

    # Default hot path: bf16 operands on the MXU, f32 accumulate + tanh.
    out_bf16 = jax.block_until_ready(bert_pooler(hidden_states, w, b))
    assert out_bf16.shape == (B, H)
    assert jnp.allclose(out_bf16, ref, atol=2e-2, rtol=2e-2), \
        "bf16-path mismatch vs reference"

    # Full-precision path for a tight numerical check.
    out_f32 = jax.block_until_ready(
        bert_pooler(hidden_states, w, b, compute_dtype=None))
    assert out_f32.shape == (B, H)
    assert jnp.allclose(out_f32, ref, atol=1e-5, rtol=1e-5), \
        "f32-path mismatch vs reference"

    print("KERNEL_OK")
</pallas_src>

<mosaic_0001>
module attributes {stable_mosaic.version = 11 : i64} {
  func.func @_bert_pooler_kernel(%arg0: i32, %arg1: i32, %arg2: memref<2x32xbf16, #tpu.memory_space<vmem>>, %arg3: memref<32x32xbf16, #tpu.memory_space<vmem>>, %arg4: memref<1x32xf32, #tpu.memory_space<vmem>>, %arg5: memref<2x32xf32, #tpu.memory_space<vmem>>) attributes {dimension_semantics = [#tpu.dimension_semantics<parallel>, #tpu.dimension_semantics<parallel>], iteration_bounds = array<i64: 1, 1>, scalar_prefetch = 0 : i64, scratch_operands = 0 : i64, tpu.core_type = #tpu.core_type<tc>, window_params = [{transform_indices = @transform_0, window_bounds = array<i64: 2, 32>}, {transform_indices = @transform_1, window_bounds = array<i64: 32, 32>}, {transform_indices = @transform_2, window_bounds = array<i64: 1, 32>}, {transform_indices = @transform_3, window_bounds = array<i64: 2, 32>}]} {
    %c0 = arith.constant 0 : index
    %c0_0 = arith.constant 0 : index
    %0 = vector.load %arg2[%c0, %c0_0] : memref<2x32xbf16, #tpu.memory_space<vmem>>, vector<2x32xbf16>
    %c0_1 = arith.constant 0 : index
    %c0_2 = arith.constant 0 : index
    %1 = vector.load %arg3[%c0_1, %c0_2] : memref<32x32xbf16, #tpu.memory_space<vmem>>, vector<32x32xbf16>
    %cst = arith.constant dense<0.000000e+00> : vector<2x32xf32>
    %2 = tpu.matmul %0, %1, %cst {dimension_numbers = #tpu.dot_dimension_numbers<[1], [0], [0], [1], [0, 0, 1, 1], [], []>} : vector<2x32xbf16>, vector<32x32xbf16>, vector<2x32xf32> -> vector<2x32xf32>
    %c0_3 = arith.constant 0 : index
    %c0_4 = arith.constant 0 : index
    %3 = vector.load %arg4[%c0_3, %c0_4] : memref<1x32xf32, #tpu.memory_space<vmem>>, vector<1x32xf32>
    %4 = vector.broadcast %3 : vector<1x32xf32> to vector<2x32xf32>
    %5 = arith.addf %2, %4 : vector<2x32xf32>
    %6 = math.tanh %5 : vector<2x32xf32>
    %c0_5 = arith.constant 0 : index
    %c0_6 = arith.constant 0 : index
    %7 = vector.load %arg5[%c0_5, %c0_6] : memref<2x32xf32, #tpu.memory_space<vmem>>, vector<2x32xf32>
    tpu.vector_store %arg5[%c0_5, %c0_6], %6 {strides = array<i32>} : memref<2x32xf32, #tpu.memory_space<vmem>>, vector<2x32xf32>,
    return
  }
  func.func @transform_0(%arg0: i32, %arg1: i32) -> (i32, i32) {
    %c0_i32 = arith.constant 0 : i32
    %c0_i32_0 = arith.constant 0 : i32
    return %arg0, %c0_i32 : i32, i32
  }
  func.func @transform_1(%arg0: i32, %arg1: i32) -> (i32, i32) {
    %c0_i32 = arith.constant 0 : i32
    %c0_i32_0 = arith.constant 0 : i32
    return %c0_i32, %arg1 : i32, i32
  }
  func.func @transform_2(%arg0: i32, %arg1: i32) -> (i32, i32) {
    %c0_i32 = arith.constant 0 : i32
    %c0_i32_0 = arith.constant 0 : i32
    return %c0_i32, %arg1 : i32, i32
  }
  func.func @transform_3(%arg0: i32, %arg1: i32) -> (i32, i32) {
    %c0_i32 = arith.constant 0 : i32
    return %arg0, %arg1 : i32, i32
  }
}

</mosaic_0001>

<llo_original>
// kernel: tpu_custom_call.1
$region0: #{tpu_custom_call.1}
  #allocation0 [shape = 'u32[]', space=smem, size = 0x4, offset = 0x4, fixed_abs, tag = 'smem constant byte address 0x4 - core index']
  #allocation1 [shape = 'u32[144,128]{1,0:T(1,128)}', space=vmem, size = 0x12000, scoped, tag = 'internal scratch']
  %s0 = inlined_call_operand.hbm [shape: bf16[2,32], index: 0, kind: input, shape index: {}]
  %s1 = inlined_call_operand.hbm [shape: bf16[32,32], index: 1, kind: input, shape index: {}]
  %s2 = inlined_call_operand.vmem [shape: f32[1,32], index: 2, kind: input, shape index: {}]
  %s3 = inlined_call_operand.hbm [shape: f32[2,32], index: 3, kind: output, shape index: {}]
  %s4 = sld [smem:[#allocation0]]
  $region30: #{tpu_custom_call.1} parent=0
    _
  %s6 = ssub.s32 1, %s4
  %s7 = scalar_select 0, %s6, %s4
  $region1: #{tpu_custom_call.1} parent=0
    #allocation2 [shape = 'u8[512]{0}', space=vmem, size = 0x400, scoped, tag = 'input window, operand 0, single buffered']
    #allocation3 [shape = 's32[1]{0}', space=sflag, size = 0x4, scoped, tag = 'scoped memory for tpu_custom_call.1']
    #allocation4 [shape = 's32[1]{0}', space=sflag, size = 0x4, scoped, tag = 'scoped memory for tpu_custom_call.1']
    #allocation5 [shape = 'u8[8192]{0}', space=vmem, size = 0x2000, scoped, tag = 'input window, operand 1, single buffered']
    #allocation6 [shape = 's32[1]{0}', space=sflag, size = 0x4, scoped, tag = 'scoped memory for tpu_custom_call.1']
    #allocation7 [shape = 'u8[1024]{0}', space=vmem, size = 0x400, scoped, tag = 'output window, operand 0, single buffered']
    %8 = vsyncpa [#allocation3], 0
    %9 = vsyncpa [#allocation6], 0
    %10 = vsyncpa [#allocation4], 0
    // Predicated region
    $region2: #{tpu_custom_call.1} parent=1 // pred_check
      _
    $region3: #{tpu_custom_call.1} parent=1 // pred_check_branch
      %12 = sbr.rel (0) target = $region5
    $region4: #{tpu_custom_call.1} parent=1 // pred_region
      %s14 = ssub.s32 16, 16
      %15 = vsyncadd [#allocation3], %s14
      %s17 = sshll.u32 [#allocation2], 4
      %s18 = int_to_ptr.vmem [resolvable:$true] %s17
      %20 = dma.hbm_to_vmem [thread:$0]  %s0, 16, %s18, [#allocation3]
    $region5: #{tpu_custom_call.1} parent=1 // pred_fallthru
      _
    // Predicated region
    $region6: #{tpu_custom_call.1} parent=1 // pred_check
      _
    $region7: #{tpu_custom_call.1} parent=1 // pred_check_branch
      %22 = sbr.rel (0) target = $region9
    $region8: #{tpu_custom_call.1} parent=1 // pred_region
      %s24 = ssub.s32 256, 256
      %25 = vsyncadd [#allocation6], %s24
      %s26 = sshll.u32 [#allocation5], 4
      %s27 = int_to_ptr.vmem [resolvable:$true] %s26
      %32 = dma.hbm_to_vmem [thread:$0]  %s1, 256, %s27, [#allocation6], 64, 64, 4
    $region9: #{tpu_custom_call.1} parent=1 // pred_fallthru
      _
    // Predicated region
    $region10: #{tpu_custom_call.1} parent=1 // pred_check
      _
    $region11: #{tpu_custom_call.1} parent=1 // pred_check_branch
      %34 = sbr.rel (0) target = $region13
    $region12: #{tpu_custom_call.1} parent=1 // pred_region
      _
    $region13: #{tpu_custom_call.1} parent=1 // pred_fallthru
      _
    // Predicated region
    $region14: #{tpu_custom_call.1} parent=1 // pred_check
      _
    $region15: #{tpu_custom_call.1} parent=1 // pred_check_branch
      %36 = sbr.rel (0) target = $region17
    $region16: #{tpu_custom_call.1} parent=1 // pred_region
      %37 = dma.done [#allocation3], 16
    $region17: #{tpu_custom_call.1} parent=1 // pred_fallthru
      _
    // Predicated region
    $region18: #{tpu_custom_call.1} parent=1 // pred_check
      _
    $region19: #{tpu_custom_call.1} parent=1 // pred_check_branch
      %39 = sbr.rel (0) target = $region21
    $region20: #{tpu_custom_call.1} parent=1 // pred_region
      %40 = dma.done [#allocation6], 256
    $region21: #{tpu_custom_call.1} parent=1 // pred_fallthru
      _
    %v42 = vld [vmem:[#allocation2] sm:$0x1]
    %v43 = vld [vmem:[#allocation5] sm:$0xf]
    %v44 = vld [vmem:[#allocation5 + $0x4] sm:$0xf]
    %v45 = vld [vmem:[#allocation5 + $0x8] sm:$0xf]
    %v46 = vld [vmem:[#allocation5 + $0xc] sm:$0xf]
    %v47 = vld [vmem:[%s2] sm:$0x1]
    %v49 = vlaneseq
    %v50 = vshrl.u32 %v49, 7
    %v51 = vsub.s32 0, %v50
    %v52 = vrot.slane %v47, %v51
    %v58 = vunpack.c.l.b16 %v43
    %v59 = vunpack.c.l.b16 %v44
    %v60 = vunpack.c.l.b16 %v45
    %v61 = vunpack.c.l.b16 %v46
    %v62 = vpack.c.b16 %v59, %v58
    %v63 = vpack.c.b16 %v61, %v60
    %vm66 = vcmask 261120
    %v68 = vsel %vm66, %v42, 0
    %70 = vmatprep.subr.bf16.mxu0 0
    %71 = vmatpush1.bf16.msra.mxu0 %v62
    %72 = vmatprep.subr.bf16.mxu0 0
    %73 = vmatpush1.bf16.msra.mxu0 %v63
    %74 = vmatprep.subr.bf16.mxu0 0
    %75 = vmatpush1.bf16.msra.mxu0 0
    %76 = vmatprep.subr.bf16.mxu0 0
    %77 = vmatpush1.bf16.msra.mxu0 0
    %78 = vmatprep.subr.bf16.mxu0 0
    %79 = vmatpush1.bf16.msra.mxu0 0
    %80 = vmatprep.subr.bf16.mxu0 0
    %81 = vmatpush1.bf16.msra.mxu0 0
    %82 = vmatprep.subr.bf16.mxu0 0
    %83 = vmatpush1.bf16.msra.mxu0 0
    %84 = vmatprep.subr.bf16.mxu0 0
    %85 = vmatpush1.bf16.msra.mxu0 0
    %86 = vmatprep.subr.bf16.mxu0 0
    %87 = vmatpush1.bf16.msra.mxu0 0
    %88 = vmatprep.subr.bf16.mxu0 0
    %89 = vmatpush1.bf16.msra.mxu0 0
    %90 = vmatprep.subr.bf16.mxu0 0
    %91 = vmatpush1.bf16.msra.mxu0 0
    %92 = vmatprep.subr.bf16.mxu0 0
    %93 = vmatpush1.bf16.msra.mxu0 0
    %94 = vmatprep.subr.bf16.mxu0 0
    %95 = vmatpush1.bf16.msra.mxu0 0
    %96 = vmatprep.subr.bf16.mxu0 0
    %97 = vmatpush1.bf16.msra.mxu0 0
    %98 = vmatprep.subr.bf16.mxu0 0
    %99 = vmatpush1.bf16.msra.mxu0 0
    %100 = vmatprep.subr.bf16.mxu0 0
    %101 = vmatpush1.bf16.msra.mxu0 0
    %102 = vmatprep.mubr.bf16.mxu0 0
    %103 = vmatmul.mubr.bf16.gmra.mrb[0].mxu0 %v68
    %v104 = vpop.f32.mrb[0].mxu0
    %v105 = vadd.f32 %v52, %v104
    %v106 = vpop.f32.mrb[0].mxu0
    %v107 = vpop.f32.mrb[0].mxu0
    %v108 = vpop.f32.mrb[0].mxu0
    %109 = vdwg.mxu0
    %v110 = vtanh.pop %v105
    %vm111 = vcmask 254976
    %112 = vst.msk [vmem:[#allocation7] sm:$0x3] %vm111, %v110
    // Predicated region
    $region22: #{tpu_custom_call.1} parent=1 // pred_check
      _
    $region23: #{tpu_custom_call.1} parent=1 // pred_check_branch
      %114 = sbr.rel (0) target = $region25
    $region24: #{tpu_custom_call.1} parent=1 // pred_region
      %s116 = ssub.s32 32, 32
      %117 = vsyncadd [#allocation4], %s116
      %s119 = sshll.u32 [#allocation7], 4
      %s120 = int_to_ptr.vmem [resolvable:$true] %s119
      %122 = dma.vmem_to_hbm [thread:$0]  %s120, 32, %s3, [#allocation4]
    $region25: #{tpu_custom_call.1} parent=1 // pred_fallthru
      _
    // Predicated region
    $region26: #{tpu_custom_call.1} parent=1 // pred_check
      _
    $region27: #{tpu_custom_call.1} parent=1 // pred_check_branch
      %124 = sbr.rel (0) target = $region29
    $region28: #{tpu_custom_call.1} parent=1 // pred_region
      %125 = dma.done [#allocation4], 32
    $region29: #{tpu_custom_call.1} parent=1 // pred_fallthru
      _
    %126 = vsyncpa [#allocation3], 1
    %127 = vsyncpa [#allocation6], 1
    %128 = vsyncpa [#allocation4], 1

</llo_original>
